<compile_context>
chip_gen: v5e
topology: v5e:2x2
jax: 0.10.0
libtpu: 0.0.40
codegen_flags: <defaults>
</compile_context>

<pallas_src>
import functools

import jax
import jax.numpy as jnp
from jax.experimental import pallas as pl
from jax.experimental.pallas import tpu as pltpu

LANES = 128
ACC_ROWS = 64            # lane-dense (64, 128) f32 partial per accumulator channel
NCORES = 2               # leading 'parallel' axis: 2 TCs on v7x, no-op on v5e/v6e
MAX_BLOCK_ROWS_2IN = 2048  # 2 f32 streams * 2 buffers * 1 MiB = 4 MiB VMEM
MAX_BLOCK_ROWS_3IN = 2048  # 3 f32 streams * 2 buffers * 1 MiB = 6 MiB VMEM


# --------------------------------------------------------------------------- #
# Shared lane-dense streaming-reduction machinery
# --------------------------------------------------------------------------- #

def _as_slab(x):
    """Flatten to a lane-dense (rows, 128) slab; zero-pad only if n % 128 != 0."""
    xf = jnp.ravel(x)                     # metadata-only for contiguous inputs
    n = xf.shape[0]
    if n % LANES != 0:
        xf = jnp.pad(xf, (0, LANES - n % LANES))
    return xf.reshape(-1, LANES)


def _grid_plan(rows, max_block_rows):
    block_rows = min(max_block_rows, rows)
    num_blocks = pl.cdiv(rows, block_rows)
    ncores = NCORES if num_blocks >= NCORES else 1
    bpc = pl.cdiv(num_blocks, ncores)            # blocks per core
    clamp = (ncores * bpc) != num_blocks         # some (c, i) map past last block
    needs_mask = clamp or (rows % block_rows != 0)

    def in_map(c, i):
        blk = c * bpc + i
        if clamp:
            blk = jnp.minimum(blk, num_blocks - 1)   # keep the DMA in-bounds
        return (blk, 0)

    return block_rows, ncores, bpc, needs_mask, in_map


def _make_reduce_kernel(per_slab, n_in, n_acc, block_rows, rows, bpc, needs_mask):
    """Stream (block_rows, 128) tiles, reduce slab-by-slab into n_acc resident
    (ACC_ROWS, 128) f32 partial-sum channels."""

    def kernel(*refs):
        in_refs = refs[:n_in]
        o_ref = refs[n_in]
        i = pl.program_id(1)

        # zero the resident per-core accumulator block at the start of its pass
        @pl.when(i == 0)
        def _():
            o_ref[...] = jnp.zeros_like(o_ref)

        # global row offset of this tile (UNclamped: tiles mapped past the end of
        # the array are clamped to a valid block by the index_map but fully masked
        # to zero here, so they contribute nothing).
        row0 = (pl.program_id(0) * bpc + i) * block_rows

        def masked_slab(lo, hi):
            parts = per_slab(in_refs, lo, hi)
            if needs_mask:
                rid = (row0 + lo) + jax.lax.broadcasted_iota(
                    jnp.int32, (hi - lo, LANES), 0)
                valid = rid < rows
                # select (not multiply) so garbage in padded / stale tile regions
                # (possibly NaN/Inf) cannot contaminate the sums.
                parts = tuple(jnp.where(valid, p, 0.0) for p in parts)
            return parts

        nfull = block_rows // ACC_ROWS
        tail = block_rows - nfull * ACC_ROWS

        if nfull > 0:
            # VPU-only slab accumulation in registers; a single RMW per channel.
            accs = list(masked_slab(0, ACC_ROWS))
            for s in range(1, nfull):
                parts = masked_slab(s * ACC_ROWS, (s + 1) * ACC_ROWS)
                for a in range(n_acc):
                    accs[a] = accs[a] + parts[a]
            for a in range(n_acc):
                o_ref[0, a, :, :] += accs[a]
        if tail:
            parts = masked_slab(nfull * ACC_ROWS, block_rows)
            for a in range(n_acc):
                o_ref[0, a, :tail, :] += parts[a]

    return kernel


def _run_reduce(slabs, per_slab, n_acc, max_block_rows):
    """Run the streaming reduction over equal-shaped (rows, 128) slabs.

    Returns a (n_acc,) f32 vector of full sums (one per accumulator channel)."""
    rows = slabs[0].shape[0]
    block_rows, ncores, bpc, needs_mask, in_map = _grid_plan(rows, max_block_rows)
    n_in = len(slabs)

    out = pl.pallas_call(
        _make_reduce_kernel(per_slab, n_in, n_acc, block_rows, rows, bpc, needs_mask),
        out_shape=jax.ShapeDtypeStruct((ncores, n_acc, ACC_ROWS, LANES), jnp.float32),
        grid_spec=pltpu.PrefetchScalarGridSpec(
            num_scalar_prefetch=0,
            grid=(ncores, bpc),
            in_specs=[pl.BlockSpec((block_rows, LANES), in_map)] * n_in,
            out_specs=pl.BlockSpec((1, n_acc, ACC_ROWS, LANES),
                                   lambda c, i: (c, 0, 0, 0)),
        ),
        compiler_params=pltpu.CompilerParams(
            dimension_semantics=("parallel", "arbitrary"),
        ),
    )(*slabs)
    # single cross-lane/sublane reduction of the lane-dense partials
    return jnp.sum(out, axis=(0, 2, 3))


# --------------------------------------------------------------------------- #
# Per-element loss bodies (run on (slab_rows, 128) register slabs)
# --------------------------------------------------------------------------- #

def _make_smooth_l1_slab(delta):
    delta = float(delta)
    half_inv_delta = (0.5 / delta) if delta > 0.0 else 0.0   # hoisted constants
    half_delta = 0.5 * delta

    def per_slab(refs, lo, hi):
        x_ref, y_ref = refs
        d = x_ref[lo:hi, :].astype(jnp.float32) - y_ref[lo:hi, :].astype(jnp.float32)
        ad = jnp.abs(d)
        return (jnp.where(ad < delta, d * d * half_inv_delta, ad - half_delta),)

    return per_slab


def _make_masked_loss_slab(loss_type, delta):
    delta = float(delta)

    def per_slab(refs, lo, hi):
        x_ref, y_ref, m_ref = refs
        d = x_ref[lo:hi, :].astype(jnp.float32) - y_ref[lo:hi, :].astype(jnp.float32)
        m = m_ref[lo:hi, :].astype(jnp.float32)
        if loss_type == "L1Loss":
            per = jnp.abs(d)
        elif loss_type == "L2Loss":
            per = d * d
        elif loss_type == "HuberLoss":
            ad = jnp.abs(d)
            # 2 * delta * smooth_l1(d, beta=delta), matching HuberLoss(reduction='none')
            per = jnp.where(ad < delta, d * d, 2.0 * delta * ad - delta * delta)
        else:
            raise ValueError(f"unknown loss_type {loss_type!r}")
        return (per * m, m)

    return per_slab


# --------------------------------------------------------------------------- #
# Public losses
# --------------------------------------------------------------------------- #

def _smooth_l1_sum(x, y, delta):
    """Sum over all elements of smooth_l1(x - y, beta=delta), via Pallas."""
    assert x.shape == y.shape
    xs = _as_slab(x)
    ys = _as_slab(y)
    sums = _run_reduce((xs, ys), _make_smooth_l1_slab(delta), 1, MAX_BLOCK_ROWS_2IN)
    return sums[0]


@functools.partial(jax.jit, static_argnames=("reduction", "delta"))
def huber_loss(input, target, reduction="mean", delta=1.0):
    """torch: 2.0 * F.smooth_l1_loss(input, target, reduction, beta=delta) * delta."""
    if reduction in ("mean", "sum"):
        s = _smooth_l1_sum(input, target, delta)
        if reduction == "mean":
            s = s / input.size
        return 2.0 * s * delta
    elif reduction == "none":
        # elementwise ('none') path kept in plain JAX; the hot paths (the
        # reductions used by WBipathLoss) are the Pallas kernels.
        half_inv_delta = (0.5 / delta) if delta > 0.0 else 0.0
        d = input.astype(jnp.float32) - target.astype(jnp.float32)
        ad = jnp.abs(d)
        per = jnp.where(ad < delta, d * d * half_inv_delta, ad - 0.5 * delta)
        return (2.0 * per * delta).astype(input.dtype)
    else:
        raise ValueError(f"unknown reduction {reduction!r}")


@functools.partial(jax.jit, static_argnames=("loss_type", "delta"))
def flow_loss_one_scale(est_flow, gt_flow, mask=None, *, loss_type="HuberLoss",
                        delta=1.0):
    """MultiScaleFlowLoss.one_scale at matching resolution (reduction='mean').

    loss = masked_mean_over_pixels( sum_over_channels( loss_fn(est, gt) ) )
    Fused single pass: masked loss sum + valid-pixel count from one kernel.
    """
    if loss_type not in ("L1Loss", "L2Loss", "HuberLoss"):
        raise ValueError(f"unknown loss_type {loss_type!r}")
    assert est_flow.shape == gt_flow.shape
    b, c = est_flow.shape[0], est_flow.shape[1]
    if mask is None:
        mask = jnp.ones((b,) + est_flow.shape[2:], dtype=jnp.float32)
    # broadcast the per-pixel validity mask over the channel dim so the kernel
    # streams three aligned lane-dense slabs (no per-channel slicing copies).
    m_b = jnp.broadcast_to(mask.astype(jnp.float32)[:, None], est_flow.shape)

    xs = _as_slab(est_flow)
    ys = _as_slab(gt_flow)
    ms = _as_slab(m_b)
    sums = _run_reduce((xs, ys, ms), _make_masked_loss_slab(loss_type, delta), 2,
                       MAX_BLOCK_ROWS_3IN)
    loss_sum, m_sum = sums[0], sums[1]
    count = m_sum / c                         # valid-pixel count (mask counted c times)
    # matches torch's early-exit `if not torch.any(mask): return 0`
    return jnp.where(count > 0, loss_sum / jnp.maximum(count, 1.0), 0.0)


def multi_scale_flow_loss(est_flows, gt_flow, masks=None, level_weights=None,
                          loss_type="HuberLoss", delta=1.0):
    """MultiScaleFlowLoss.forward for the W-bipath composed flows.

    TODO(synk): bilinear F.interpolate level resizing, warp/grid_sample flow
    composition and the correspondence / cyclic-visibility mask construction of
    WBipathLoss are not ported; each level's flow/mask must already be at the
    ground-truth resolution here.
    """
    if not isinstance(est_flows, (list, tuple)):
        est_flows = [est_flows]
    if level_weights is None:
        level_weights = [1.0] * len(est_flows)
    assert len(level_weights) == len(est_flows)
    total = 0.0
    for i, (flow, w) in enumerate(zip(est_flows, level_weights)):
        m = masks[i] if isinstance(masks, (list, tuple)) else masks
        assert flow.shape[-2:] == gt_flow.shape[-2:], "resize not ported (see TODO)"
        total = total + w * flow_loss_one_scale(flow, gt_flow, m,
                                                loss_type=loss_type, delta=delta)
    return total


# --------------------------------------------------------------------------- #
# Self-test
# --------------------------------------------------------------------------- #

if __name__ == "__main__":
    key = jax.random.PRNGKey(0)
    ks = jax.random.split(key, 12)

    def ref_huber(x, t, delta=1.0, reduction="mean"):
        d = x.astype(jnp.float32) - t.astype(jnp.float32)
        ad = jnp.abs(d)
        per = jnp.where(ad < delta, 0.5 * d * d / delta, ad - 0.5 * delta)
        red = jnp.mean(per) if reduction == "mean" else jnp.sum(per)
        return 2.0 * red * delta

    def ref_one_scale(est, gt, mask, loss_type, delta=1.0):
        d = est.astype(jnp.float32) - gt.astype(jnp.float32)
        if loss_type == "L1Loss":
            per = jnp.abs(d)
        elif loss_type == "L2Loss":
            per = d * d
        else:
            ad = jnp.abs(d)
            per = jnp.where(ad < delta, d * d, 2.0 * delta * ad - delta * delta)
        per_px = per.sum(axis=1)
        m = mask.astype(jnp.float32)
        s = jnp.sum(per_px * m)
        c = jnp.sum(m)
        return jnp.where(c > 0, s / c, 0.0)

    # 1) HuberLoss mean, small NCHW f32 (single-tile path)
    x = jax.random.normal(ks[0], (2, 4, 16, 16), jnp.float32)
    t = jax.random.normal(ks[1], (2, 4, 16, 16), jnp.float32)
    got = jax.block_until_ready(huber_loss(x, t, reduction="mean", delta=1.0))
    want = ref_huber(x, t)
    assert jnp.allclose(got, want, rtol=1e-5, atol=1e-6), (got, want)

    # 2) HuberLoss sum, multi-tile path: 2-core split, clamping, tail masking
    x2 = jax.random.normal(ks[2], (2, 2, 352, 384), jnp.float32)
    t2 = jax.random.normal(ks[3], (2, 2, 352, 384), jnp.float32)
    got = jax.block_until_ready(huber_loss(x2, t2, reduction="sum", delta=0.5))
    want = ref_huber(x2, t2, delta=0.5, reduction="sum")
    assert jnp.allclose(got, want, rtol=1e-4, atol=1e-2), (got, want)

    # 3) element count not a multiple of 128 (pad fallback) + 'none' path
    xo = jax.random.normal(ks[4], (3, 7, 5), jnp.float32)
    to = jax.random.normal(ks[5], (3, 7, 5), jnp.float32)
    got = jax.block_until_ready(huber_loss(xo, to, reduction="mean", delta=2.0))
    want = ref_huber(xo, to, delta=2.0)
    assert jnp.allclose(got, want, rtol=1e-5, atol=1e-6), (got, want)
    got_none = huber_loss(xo, to, reduction="none", delta=1.0)
    d = xo - to
    want_none = 2.0 * jnp.where(jnp.abs(d) < 1.0, 0.5 * d * d, jnp.abs(d) - 0.5)
    assert got_none.shape == xo.shape
    assert jnp.allclose(got_none, want_none, rtol=1e-5, atol=1e-6)

    # 4) masked one_scale flow loss (WBipathLoss objective hot path), small flow
    b, h, w = 2, 16, 16
    est = jax.random.normal(ks[6], (b, 2, h, w), jnp.float32)
    gt = jax.random.normal(ks[7], (b, 2, h, w), jnp.float32)
    mask = jax.random.uniform(ks[8], (b, h, w)) > 0.3
    for lt in ("HuberLoss", "L1Loss", "L2Loss"):
        got = jax.block_until_ready(flow_loss_one_scale(est, gt, mask, loss_type=lt))
        want = ref_one_scale(est, gt, mask, lt)
        assert jnp.allclose(got, want, rtol=1e-5, atol=1e-5), (lt, got, want)

    # 5) multi-scale, bf16 flows, big level: multi-tile + clamped-core + tail path
    est_b = jax.random.normal(ks[9], (2, 2, 352, 384), jnp.float32).astype(jnp.bfloat16)
    gt_b = jax.random.normal(ks[10], (2, 2, 352, 384), jnp.float32).astype(jnp.bfloat16)
    mask_b = jax.random.uniform(ks[11], (2, 352, 384)) > 0.5
    got = jax.block_until_ready(
        multi_scale_flow_loss([est_b, est_b], gt_b, masks=[mask_b, mask_b],
                              level_weights=[0.32, 0.08], loss_type="HuberLoss"))
    want = 0.4 * ref_one_scale(est_b, gt_b, mask_b, "HuberLoss")
    assert jnp.allclose(got, want, rtol=1e-3, atol=1e-3), (got, want)

    # 6) all-False mask returns 0 (matches torch early-exit)
    got = jax.block_until_ready(
        flow_loss_one_scale(est, gt, jnp.zeros((b, h, w), bool), loss_type="L2Loss"))
    assert jnp.allclose(got, 0.0)

    print("KERNEL_OK")
</pallas_src>

<mosaic_0001>
module attributes {stable_mosaic.version = 11 : i64} {
  func.func @kernel(%arg0: i32, %arg1: i32, %arg2: memref<16x128xf32, #tpu.memory_space<vmem>>, %arg3: memref<16x128xf32, #tpu.memory_space<vmem>>, %arg4: memref<1x1x64x128xf32, #tpu.memory_space<vmem>>) attributes {dimension_semantics = [#tpu.dimension_semantics<parallel>, #tpu.dimension_semantics<arbitrary>], iteration_bounds = array<i64: 1, 1>, scalar_prefetch = 0 : i64, scratch_operands = 0 : i64, tpu.core_type = #tpu.core_type<tc>, window_params = [{transform_indices = @transform_0, window_bounds = array<i64: 16, 128>}, {transform_indices = @transform_1, window_bounds = array<i64: 16, 128>}, {transform_indices = @transform_2, window_bounds = array<i64: 1, 1, 64, 128>}]} {
    %c0_i32 = arith.constant 0 : i32
    %0 = arith.cmpi eq, %arg1, %c0_i32 : i32
    %1 = arith.extui %0 : i1 to i32
    %c0_i32_0 = arith.constant 0 : i32
    %2 = arith.cmpi ne, %1, %c0_i32_0 : i32
    scf.if %2 {
      %cst_14 = arith.constant 0.000000e+00 : f32
      %21 = vector.broadcast %cst_14 : f32 to vector<1x1x64x128xf32>
      %c0_15 = arith.constant 0 : index
      %c0_16 = arith.constant 0 : index
      %c0_17 = arith.constant 0 : index
      %c0_18 = arith.constant 0 : index
      %22 = vector.load %arg4[%c0_15, %c0_16, %c0_17, %c0_18] : memref<1x1x64x128xf32, #tpu.memory_space<vmem>>, vector<1x1x64x128xf32>
      tpu.vector_store %arg4[%c0_15, %c0_16, %c0_17, %c0_18], %21 {strides = array<i32>} : memref<1x1x64x128xf32, #tpu.memory_space<vmem>>, vector<1x1x64x128xf32>,
    } else {
    }
    %c0 = arith.constant 0 : index
    %c0_1 = arith.constant 0 : index
    %3 = vector.load %arg2[%c0, %c0_1] : memref<16x128xf32, #tpu.memory_space<vmem>>, vector<16x128xf32>
    %c0_2 = arith.constant 0 : index
    %c0_3 = arith.constant 0 : index
    %4 = vector.load %arg3[%c0_2, %c0_3] : memref<16x128xf32, #tpu.memory_space<vmem>>, vector<16x128xf32>
    %5 = arith.subf %3, %4 : vector<16x128xf32>
    %6 = math.absf %5 : vector<16x128xf32>
    %cst = arith.constant 1.000000e+00 : f32
    %7 = vector.broadcast %cst : f32 to vector<16x128xf32>
    %8 = arith.cmpf olt, %6, %7 : vector<16x128xf32>
    %9 = arith.mulf %5, %5 : vector<16x128xf32>
    %cst_4 = arith.constant 5.000000e-01 : f32
    %10 = vector.broadcast %cst_4 : f32 to vector<16x128xf32>
    %11 = arith.mulf %9, %10 : vector<16x128xf32>
    %cst_5 = arith.constant 5.000000e-01 : f32
    %12 = vector.broadcast %cst_5 : f32 to vector<16x128xf32>
    %13 = arith.subf %6, %12 : vector<16x128xf32>
    %14 = arith.select %8, %11, %13 : vector<16x128xi1>, vector<16x128xf32>
    %c0_6 = arith.constant 0 : index
    %c0_7 = arith.constant 0 : index
    %c0_8 = arith.constant 0 : index
    %c0_9 = arith.constant 0 : index
    %15 = vector.load %arg4[%c0_6, %c0_7, %c0_8, %c0_9] : memref<1x1x64x128xf32, #tpu.memory_space<vmem>>, vector<1x1x16x128xf32>
    %16 = vector.shape_cast %15 : vector<1x1x16x128xf32> to vector<16x128xf32>
    %17 = arith.addf %16, %14 : vector<16x128xf32>
    %c0_10 = arith.constant 0 : index
    %c0_11 = arith.constant 0 : index
    %c0_12 = arith.constant 0 : index
    %c0_13 = arith.constant 0 : index
    %18 = vector.load %arg4[%c0_10, %c0_11, %c0_12, %c0_13] : memref<1x1x64x128xf32, #tpu.memory_space<vmem>>, vector<1x1x16x128xf32>
    %19 = vector.shape_cast %18 : vector<1x1x16x128xf32> to vector<16x128xf32>
    %20 = vector.shape_cast %17 : vector<16x128xf32> to vector<1x1x16x128xf32>
    tpu.vector_store %arg4[%c0_10, %c0_11, %c0_12, %c0_13], %20 {strides = array<i32>} : memref<1x1x64x128xf32, #tpu.memory_space<vmem>>, vector<1x1x16x128xf32>,
    return
  }
  func.func @transform_0(%arg0: i32, %arg1: i32) -> (i32, i32) {
    %c1_i32 = arith.constant 1 : i32
    %0 = arith.muli %arg0, %c1_i32 : i32
    %1 = arith.addi %0, %arg1 : i32
    %c0_i32 = arith.constant 0 : i32
    %c0_i32_0 = arith.constant 0 : i32
    return %1, %c0_i32 : i32, i32
  }
  func.func @transform_1(%arg0: i32, %arg1: i32) -> (i32, i32) {
    %c1_i32 = arith.constant 1 : i32
    %0 = arith.muli %arg0, %c1_i32 : i32
    %1 = arith.addi %0, %arg1 : i32
    %c0_i32 = arith.constant 0 : i32
    %c0_i32_0 = arith.constant 0 : i32
    return %1, %c0_i32 : i32, i32
  }
  func.func @transform_2(%arg0: i32, %arg1: i32) -> (i32, i32, i32, i32) {
    %c0_i32 = arith.constant 0 : i32
    %c0_i32_0 = arith.constant 0 : i32
    %c0_i32_1 = arith.constant 0 : i32
    %c0_i32_2 = arith.constant 0 : i32
    return %arg0, %c0_i32, %c0_i32_0, %c0_i32_1 : i32, i32, i32, i32
  }
}

</mosaic_0001>

<llo_original>
// kernel: huber_loss.1
$region0: #{huber_loss.1}
  #allocation0 [shape = 'u32[]', space=smem, size = 0x4, offset = 0x4, fixed_abs, tag = 'smem constant byte address 0x4 - core index']
  #allocation1 [shape = 'u32[72,128]{1,0:T(1,128)}', space=vmem, size = 0x9000, scoped, tag = 'internal scratch']
  %s0 = inlined_call_operand.vmem [shape: f32[16,128], index: 0, kind: input, shape index: {}]
  %s1 = inlined_call_operand.vmem [shape: f32[16,128], index: 1, kind: input, shape index: {}]
  %s2 = inlined_call_operand.vmem [shape: f32[1,1,64,128], index: 2, kind: output, shape index: {}]
  %s3 = sld [smem:[#allocation0]]
  $region22: #{huber_loss.1} parent=0
    _
  %s5 = ssub.s32 1, %s3
  %s6 = scalar_select 0, %s5, %s3
  // Predicated region
  $region2: #{huber_loss.1} parent=0 // pred_check
    _
  $region3: #{huber_loss.1} parent=0 // pred_check_branch
    %8 = sbr.rel (0) target = $region5
  $region4: #{huber_loss.1} parent=0 // pred_region
    %s9 = sadd.s32 0, 0
    %s10 = smul.u32 2, %s9
    %p11 = scmp.lt.s32.totalorder %s10, 1
    %s12 = scalar_select %p11, %s10, 1
    %s13 = smul.addr %s12, 8
    %s14 = scalar_lea.vmem %s0, %s13
    %s15 = sadd.s32 0, 0
    %s16 = smul.u32 2, %s15
  $region5: #{huber_loss.1} parent=0 // pred_fallthru
    _
  // Predicated region
  $region6: #{huber_loss.1} parent=0 // pred_check
    _
  $region7: #{huber_loss.1} parent=0 // pred_check_branch
    %18 = sbr.rel (0) target = $region9
  $region8: #{huber_loss.1} parent=0 // pred_region
    %s19 = sadd.s32 0, 0
    %s20 = smul.u32 2, %s19
    %p21 = scmp.lt.s32.totalorder %s20, 1
    %s22 = scalar_select %p21, %s20, 1
    %s23 = smul.addr %s22, 8
    %s24 = scalar_lea.vmem %s1, %s23
    %s25 = sadd.s32 0, 0
    %s26 = smul.u32 2, %s25
  $region9: #{huber_loss.1} parent=0 // pred_fallthru
    _
  %s27 = sadd.s32 0, 0
  %s28 = smul.u32 2, %s27
  %p29 = scmp.lt.s32.totalorder %s28, 1
  %s30 = scalar_select %p29, %s28, 1
  %s31 = smul.addr %s30, 8
  %s32 = scalar_lea.vmem %s0, %s31
  %s33 = sadd.s32 0, 0
  %s34 = smul.u32 2, %s33
  %p35 = scmp.lt.s32.totalorder %s34, 1
  %s36 = scalar_select %p35, %s34, 1
  %s37 = smul.addr %s36, 8
  %s38 = scalar_lea.vmem %s1, %s37
  %s39 = sadd.s32 0, 0
  %s40 = smul.u32 2, %s39
  %p41 = scmp.lt.s32.totalorder %s40, 1
  %s42 = scalar_select %p41, %s40, 1
  %s43 = smul.addr %s42, 8
  %s44 = scalar_lea.vmem %s0, %s43
  %s45 = sadd.s32 0, 0
  %s46 = smul.u32 2, %s45
  %s47 = sadd.s32 0, 0
  %s48 = smul.u32 2, %s47
  %p49 = scmp.lt.s32.totalorder %s48, 1
  %s50 = scalar_select %p49, %s48, 1
  %s51 = smul.addr %s50, 8
  %s52 = scalar_lea.vmem %s1, %s51
  %s53 = sadd.s32 0, 0
  %s54 = smul.u32 2, %s53
  %p55 = scmp.eq.s32.totalorder 0, 0
  // Predicated region
  $region10: #{huber_loss.1} parent=0 // pred_check
    %p56 = pneg %p55
  $region11: #{huber_loss.1} parent=0 // pred_check_branch
    %58 = sbr.rel (%p56) target = $region13
  $region12: #{huber_loss.1} parent=0 // pred_region
    %59 = vst [vmem:[%s2] sm:$0xff] 0.0
    %60 = vst [vmem:[%s2 + $0x8] sm:$0xff] 0.0
    %61 = vst [vmem:[%s2 + $0x10] sm:$0xff] 0.0
    %62 = vst [vmem:[%s2 + $0x18] sm:$0xff] 0.0
    %63 = vst [vmem:[%s2 + $0x20] sm:$0xff] 0.0
    %64 = vst [vmem:[%s2 + $0x28] sm:$0xff] 0.0
    %65 = vst [vmem:[%s2 + $0x30] sm:$0xff] 0.0
    %66 = vst [vmem:[%s2 + $0x38] sm:$0xff] 0.0
  $region13: #{huber_loss.1} parent=0 // pred_fallthru
    _
  %v67 = vld [vmem:[%s44] sm:$0xff]
  %v68 = vld [vmem:[%s44 + $0x8] sm:$0xff]
  %v69 = vld [vmem:[%s52] sm:$0xff]
  %v70 = vld [vmem:[%s52 + $0x8] sm:$0xff]
  %v71 = vsub.f32 %v67, %v69
  %v72 = vsub.f32 %v68, %v70
  %v73 = vand.u32 2147483647, %v71
  %v74 = vand.u32 2147483647, %v72
  %vm75 = vcmp.lt.f32.partialorder %v73, 1.0
  %vm76 = vcmp.lt.f32.partialorder %v74, 1.0
  %v77 = vmul.f32 %v71, %v71
  %v78 = vmul.f32 %v72, %v72
  %v79 = vmul.f32 %v77, 0.5
  %v80 = vmul.f32 %v78, 0.5
  %v81 = vsub.f32 %v73, 0.5
  %v82 = vsub.f32 %v74, 0.5
  %v83 = vsel %vm75, %v79, %v81
  %v84 = vsel %vm76, %v80, %v82
  %v85 = vld [vmem:[%s2] sm:$0xff]
  %v86 = vld [vmem:[%s2 + $0x8] sm:$0xff]
  %v87 = vadd.f32 %v85, %v83
  %v88 = vadd.f32 %v86, %v84
  %89 = vst [vmem:[%s2] sm:$0xff] %v87
  %90 = vst [vmem:[%s2 + $0x8] sm:$0xff] %v88
  // Predicated region
  $region14: #{huber_loss.1} parent=0 // pred_check
    _
  $region15: #{huber_loss.1} parent=0 // pred_check_branch
    %92 = sbr.rel (0) target = $region17
  $region16: #{huber_loss.1} parent=0 // pred_region
    _
  $region17: #{huber_loss.1} parent=0 // pred_fallthru
    _
  // Predicated region
  $region18: #{huber_loss.1} parent=0 // pred_check
    _
  $region19: #{huber_loss.1} parent=0 // pred_check_branch
    %94 = sbr.rel (0) target = $region21
  $region20: #{huber_loss.1} parent=0 // pred_region
    _
  $region21: #{huber_loss.1} parent=0 // pred_fallthru
    _

</llo_original>
